<compile_context>
chip_gen: v7x
topology: tpu7x:2x2x1
jax: 0.10.0
libtpu: 0.0.40
codegen_flags: <defaults>
</compile_context>

<pallas_src>
import jax
import jax.numpy as jnp
from jax.experimental import pallas as pl
from jax.experimental.pallas import tpu as pltpu


def _matmul_bias_kernel(p_ref, w_ref, b_ref, o_ref):
    """One (pixel-tile, batch) block: O = P @ W + B.

    p_ref: (TP, K)     im2col patches for TP output pixels
    w_ref: (K, COUT)   flattened weights (resident across the grid)
    b_ref: (TP, COUT)  untied-bias tile (resident across the batch axis)
    o_ref: (TP, COUT)  output tile
    """
    acc = jnp.dot(p_ref[...], w_ref[...], preferred_element_type=jnp.float32)
    acc = acc + b_ref[...].astype(jnp.float32)
    o_ref[...] = acc.astype(o_ref.dtype)


def _vmem_budgets():
    """(per-step block budget, vmem_limit_bytes) tuned per TPU generation."""
    cap = None
    try:
        cap = getattr(pltpu.get_tpu_info(), "vmem_capacity_bytes", None)
    except Exception:
        cap = None
    if cap is None:
        cap = 64 << 20                      # unknown -> assume smallest (v7x)
    if cap >= (100 << 20):                  # v5e / v6e: 128 MiB physical VMEM
        return 32 << 20, 64 << 20
    return 20 << 20, 48 << 20               # v7x: 64 MiB physical VMEM


def _pick_pixel_tile(P, K, COUT, in_isz, b_isz, out_isz, w_bytes, budget_bytes):
    """Largest pixel-tile (multiple of 8, or the full extent P) whose
    double-buffered blocks — including the resident weights — fit the budget."""
    per_pixel = 2 * (K * in_isz + COUT * (b_isz + out_isz))   # x2: double buffer
    avail = budget_bytes - 2 * w_bytes                        # weights, x2 conservatively
    if avail <= 0:
        # TODO(synk): fall back to tiling K / COUT for extreme weight sizes.
        raise ValueError(
            f"weight block ({w_bytes} bytes, double-buffered) alone exceeds the "
            f"VMEM budget ({budget_bytes} bytes)")
    max_tp = avail // per_pixel
    if max_tp >= P:
        return P
    if max_tp < 8:
        # TODO(synk): fall back to tiling K / COUT / OW for extreme shapes.
        raise ValueError(
            f"cannot fit even an 8-pixel tile (K={K}, COUT={COUT}) in the VMEM "
            f"budget ({budget_bytes} bytes)")
    return int(max_tp // 8) * 8


def conv2d_untied_bias(x_nchw, weight_oihw, bias_chw,
                       stride=(1, 1), padding=(0, 0), dilation=(1, 1), groups=1):
    """Forward pass of Conv2dUntiedBias. Inputs/outputs use PyTorch layouts
    (x: NCHW, weight: OIHW, bias: (Cout, OH, OW)); returns NCHW."""
    if groups != 1:
        # TODO(synk): grouped convolution not implemented in the kernel.
        raise NotImplementedError("groups != 1 not supported")

    COUT, CIN, KH, KW = (int(d) for d in weight_oihw.shape)
    sh, sw = (int(s) for s in stride)
    ph, pw = (int(p) for p in padding)
    dh, dw = (int(d) for d in dilation)

    # Module quirk: `if not self.kernel_size[0] % 2 and self.padding:` —
    # self.padding is a (non-empty) tuple, hence truthy, so the asymmetric
    # (1,0,1,0) pre-pad fires for every even kernel HEIGHT regardless of the
    # padding values (kernel_size[1] is ignored, exactly as in PyTorch).
    if KH % 2 == 0:
        x_nchw = jnp.pad(x_nchw, ((0, 0), (0, 0), (1, 0), (1, 0)))

    # NCHW -> NHWC + symmetric conv padding (layout glue, not the hot path).
    x = jnp.transpose(x_nchw, (0, 2, 3, 1))
    x = jnp.pad(x, ((0, 0), (ph, ph), (pw, pw), (0, 0)))
    N, HP, WP, _ = x.shape

    # Output size from the conv arithmetic; must agree with the bias shape.
    OH = (HP - (KH - 1) * dh - 1) // sh + 1
    OW = (WP - (KW - 1) * dw - 1) // sw + 1
    if (int(bias_chw.shape[1]), int(bias_chw.shape[2])) != (OH, OW):
        raise ValueError(
            f"bias spatial shape {tuple(bias_chw.shape[1:])} does not match "
            f"conv output spatial shape ({OH}, {OW})")

    # Wrapper-side im2col: (N, OH, OW, KH*KW*CIN), last-dim order (kh, kw, cin).
    # No HBM-side zero padding of K — the natural extent goes straight to VMEM.
    cols = []
    for kh in range(KH):
        for kw in range(KW):
            h0, w0 = kh * dh, kw * dw
            cols.append(x[:, h0:h0 + (OH - 1) * sh + 1:sh,
                           w0:w0 + (OW - 1) * sw + 1:sw, :])
    K = KH * KW * CIN
    P = OH * OW
    patches = jnp.concatenate(cols, axis=-1).reshape(N, P, K)

    # (COUT, CIN, KH, KW) -> (KH, KW, CIN, COUT) -> (K, COUT); no padding.
    w_mat = jnp.transpose(weight_oihw, (2, 3, 1, 0)).reshape(K, COUT)

    # Bias: (COUT, OH, OW) -> (P, COUT); no channel padding.
    b_pc = jnp.transpose(bias_chw, (1, 2, 0)).reshape(P, COUT)

    in_isz = jnp.dtype(patches.dtype).itemsize
    b_isz = jnp.dtype(b_pc.dtype).itemsize
    out_isz = jnp.dtype(x.dtype).itemsize
    w_bytes = K * COUT * jnp.dtype(w_mat.dtype).itemsize

    budget_bytes, vmem_limit = _vmem_budgets()
    TP = _pick_pixel_tile(P, K, COUT, in_isz, b_isz, out_isz, w_bytes, budget_bytes)

    # v7x has 2 TensorCores: make sure the 'parallel' grid exposes >= 2 blocks.
    if N == 1 and TP >= P and P > 8:
        half = (P + 1) // 2
        TP = min(TP, ((half + 7) // 8) * 8)

    grid = (pl.cdiv(P, TP), N)   # batch innermost: bias/weight blocks stay put

    out_flat = pl.pallas_call(
        _matmul_bias_kernel,
        out_shape=jax.ShapeDtypeStruct((N, P, COUT), x.dtype),
        grid=grid,
        in_specs=[
            # patches: one batch element, TP output pixels, full K (last dims
            # are full-extent, so no (8,128) divisibility issue and no padding).
            pl.BlockSpec((None, TP, K), lambda t, n: (n, t, 0)),
            # weights: constant block index -> fetched once, resident.
            pl.BlockSpec((K, COUT), lambda t, n: (0, 0)),
            # untied bias: independent of the (innermost) batch axis -> no
            # re-DMA across consecutive grid steps.
            pl.BlockSpec((TP, COUT), lambda t, n: (t, 0)),
        ],
        out_specs=pl.BlockSpec((None, TP, COUT), lambda t, n: (n, t, 0)),
        compiler_params=pltpu.CompilerParams(
            dimension_semantics=("parallel", "parallel"),
            vmem_limit_bytes=vmem_limit),
    )(patches, w_mat, b_pc)

    # (N, P, COUT) -> (N, OH, OW, COUT) -> PyTorch NCHW.
    return jnp.transpose(out_flat.reshape(N, OH, OW, COUT), (0, 3, 1, 2))


def _reference(x_nchw, weight_oihw, bias_chw, stride, padding, dilation):
    """Pure-JAX reference (mirrors F.conv2d + untied bias)."""
    out = jax.lax.conv_general_dilated(
        x_nchw, weight_oihw,
        window_strides=stride,
        padding=[(padding[0], padding[0]), (padding[1], padding[1])],
        rhs_dilation=dilation,
        dimension_numbers=("NCHW", "OIHW", "NCHW"))
    return out + bias_chw[None]


if __name__ == "__main__":
    # Module config (matches Conv2dUntiedBias(height=16, width=16, in_channels=4,
    #                 out_channels=8, kernel_size=3, padding=1)).
    N, CIN, H, W = 2, 4, 16, 16
    COUT, Ksz = 8, 3
    stride, padding, dilation = (1, 1), (1, 1), (1, 1)
    OH, OW = 16, 16
    bias_init, weight_std = 0.1, 0.01

    key = jax.random.PRNGKey(0)
    kx, kw = jax.random.split(key)

    x = jax.random.normal(kx, (N, CIN, H, W), dtype=jnp.float32)
    # weight ~ U(-weight_std, weight_std), bias filled with bias_init
    weight = jax.random.uniform(kw, (COUT, CIN, Ksz, Ksz), dtype=jnp.float32,
                                minval=-weight_std, maxval=weight_std)
    bias = jnp.full((COUT, OH, OW), bias_init, dtype=jnp.float32)

    out = conv2d_untied_bias(x, weight, bias, stride, padding, dilation, groups=1)
    out = jax.block_until_ready(out)

    ref = _reference(x, weight, bias, stride, padding, dilation)
    assert out.shape == (N, COUT, OH, OW), out.shape
    err = float(jnp.max(jnp.abs(out - ref)))
    assert jnp.allclose(out, ref, atol=5e-5, rtol=1e-5), \
        f"mismatch vs reference, max abs err={err}"

    print("KERNEL_OK")
</pallas_src>

<mosaic_0001>
module attributes {stable_mosaic.version = 11 : i64} {
  func.func @_matmul_bias_kernel(%arg0: i32, %arg1: i32, %arg2: memref<1x256x36xf32, #tpu.memory_space<vmem>>, %arg3: memref<36x8xf32, #tpu.memory_space<vmem>>, %arg4: memref<256x8xf32, #tpu.memory_space<vmem>>, %arg5: memref<1x256x8xf32, #tpu.memory_space<vmem>>) attributes {dimension_semantics = [#tpu.dimension_semantics<parallel>, #tpu.dimension_semantics<parallel>], iteration_bounds = array<i64: 1, 2>, scalar_prefetch = 0 : i64, scratch_operands = 0 : i64, tpu.core_type = #tpu.core_type<tc>, window_params = [{transform_indices = @transform_0, window_bounds = array<i64: 1, 256, 36>}, {pipeline_mode = #tpu.pipeline_mode<synchronous>, transform_indices = @transform_1, window_bounds = array<i64: 36, 8>}, {transform_indices = @transform_2, window_bounds = array<i64: 256, 8>}, {transform_indices = @transform_3, window_bounds = array<i64: 1, 256, 8>}]} {
    %c0 = arith.constant 0 : index
    %c0_0 = arith.constant 0 : index
    %c0_1 = arith.constant 0 : index
    %0 = vector.load %arg2[%c0, %c0_0, %c0_1] : memref<1x256x36xf32, #tpu.memory_space<vmem>>, vector<1x256x36xf32>
    %1 = vector.shape_cast %0 : vector<1x256x36xf32> to vector<256x36xf32>
    %c0_2 = arith.constant 0 : index
    %c0_3 = arith.constant 0 : index
    %2 = vector.load %arg3[%c0_2, %c0_3] : memref<36x8xf32, #tpu.memory_space<vmem>>, vector<36x8xf32>
    %cst = arith.constant dense<0.000000e+00> : vector<256x8xf32>
    %3 = tpu.matmul %1, %2, %cst {dimension_numbers = #tpu.dot_dimension_numbers<[1], [0], [0], [1], [0, 0, 1, 1], [], []>} : vector<256x36xf32>, vector<36x8xf32>, vector<256x8xf32> -> vector<256x8xf32>
    %c0_4 = arith.constant 0 : index
    %c0_5 = arith.constant 0 : index
    %4 = vector.load %arg4[%c0_4, %c0_5] : memref<256x8xf32, #tpu.memory_space<vmem>>, vector<256x8xf32>
    %5 = arith.addf %3, %4 : vector<256x8xf32>
    %c0_6 = arith.constant 0 : index
    %c0_7 = arith.constant 0 : index
    %c0_8 = arith.constant 0 : index
    %6 = vector.load %arg5[%c0_6, %c0_7, %c0_8] : memref<1x256x8xf32, #tpu.memory_space<vmem>>, vector<1x256x8xf32>
    %7 = vector.shape_cast %6 : vector<1x256x8xf32> to vector<256x8xf32>
    %8 = vector.shape_cast %5 : vector<256x8xf32> to vector<1x256x8xf32>
    tpu.vector_store %arg5[%c0_6, %c0_7, %c0_8], %8 {strides = array<i32>} : memref<1x256x8xf32, #tpu.memory_space<vmem>>, vector<1x256x8xf32>,
    return
  }
  func.func @transform_0(%arg0: i32, %arg1: i32) -> (i32, i32, i32) {
    %c0_i32 = arith.constant 0 : i32
    %c0_i32_0 = arith.constant 0 : i32
    return %arg1, %arg0, %c0_i32 : i32, i32, i32
  }
  func.func @transform_1(%arg0: i32, %arg1: i32) -> (i32, i32) {
    %c0_i32 = arith.constant 0 : i32
    %c0_i32_0 = arith.constant 0 : i32
    %c0_i32_1 = arith.constant 0 : i32
    return %c0_i32, %c0_i32_0 : i32, i32
  }
  func.func @transform_2(%arg0: i32, %arg1: i32) -> (i32, i32) {
    %c0_i32 = arith.constant 0 : i32
    %c0_i32_0 = arith.constant 0 : i32
    return %arg0, %c0_i32 : i32, i32
  }
  func.func @transform_3(%arg0: i32, %arg1: i32) -> (i32, i32, i32) {
    %c0_i32 = arith.constant 0 : i32
    %c0_i32_0 = arith.constant 0 : i32
    return %arg1, %arg0, %c0_i32 : i32, i32, i32
  }
}

</mosaic_0001>

<llo_original>
// kernel: tpu_custom_call.1
$region0: #{tpu_custom_call.1}
  #allocation0 [shape = 'u32[]', space=smem, size = 0x4, offset = 0x4, fixed_abs, tag = 'smem constant byte address 0x4 - core index']
  #allocation1 [shape = 'u32[144,128]{1,0:T(1,128)}', space=vmem, size = 0x12000, scoped, tag = 'internal scratch']
  %s0 = inlined_call_operand.vmem [shape: f32[2,256,36], index: 0, kind: input, shape index: {}]
  %s1 = inlined_call_operand.vmem [shape: f32[36,8], index: 1, kind: input, shape index: {}]
  %s2 = inlined_call_operand.vmem [shape: f32[256,8], index: 2, kind: input, shape index: {}]
  %s3 = inlined_call_operand.vmem [shape: f32[2,256,8], index: 3, kind: output, shape index: {}]
  %s4 = sld [smem:[#allocation0]]
  $region45: #{tpu_custom_call.1} parent=0
    _
  %s6 = ssub.s32 1, %s4
  %s7 = scalar_select 0, %s6, %s4
  loop: start=0, step=1, limit=4
  $region2: #{tpu_custom_call.1} parent=0 // loop_pre_header
    _
  $region3: #{tpu_custom_call.1} parent=0 // loop_header
    %s9 = sphi 0, %s13
    %p10 = scmp.ge.s32.totalorder %s9, 4
    %s16 = sphi 0, %s28
    %s17 = sphi 0, %s24
    %s18 = sphi 0, %s16
    %s19 = sphi 0, %s17
    %s20 = sphi 0, %s18
    %s21 = sphi 0, %s19
    %s33 = sphi 0, %s35
    %s36 = sphi 0, %s33
    %s37 = sphi 0, %s36
    %s53 = sphi 0, %s37
    %s57 = sphi 0, %s57
    %s59 = sphi 0, %s57
    %s60 = sphi 0, %s59
    %s74 = sphi 0, %s60
    %s80 = sphi 0, %s82
    %s83 = sphi 0, %s80
    %s84 = sphi 0, %s83
    %s100 = sphi 0, %s84
    %s108 = sphi 0, %s110
    %s111 = sphi 0, %s108
    %s112 = sphi 0, %s111
    %s128 = sphi 0, %s112
  $region4: #{tpu_custom_call.1} parent=0 // loop_header_branch
    %12 = sbr.rel (%p10) target = $region8
  $region5: #{tpu_custom_call.1} parent=0 // loop_body
    %s14 = ssub.s32 %s9, 1
    %s15 = ssub.s32 %s9, 2
    %s22 = sadd.s32 1, %s17
    %p23 = scmp.ge.s32.totalorder %s22, 2
    %s24 = scalar_select %p23, 0, %s22
    %s25 = sadd.s32 1, %s16
    %s26 = scalar_select %p23, %s25, %s16
    %p27 = scmp.ge.s32.totalorder %s26, 1
    %s28 = scalar_select %p27, 0, %s26
    %s29 = ssub.s32 %s17, %s24
    %s30 = ssub.s32 %s16, %s28
    %s31 = sor.u32 %s29, %s30
    %p32 = scmp.eq.s32.totalorder %s31, 0
    %s34 = sadd.s32 %s33, 1
    %s35 = scalar_select %p32, %s33, %s34
    %p38 = pneg %p32
    %p39 = scmp.eq.s32.totalorder %s9, 1
    %p40 = por %p38, %p39
    %p41 = scmp.ne.s32.totalorder %s33, %s36
    %p42 = scmp.eq.s32.totalorder %s9, 0
    %p43 = por %p41, %p42
    %p44 = scmp.ne.s32.totalorder %s33, %s36
    %p45 = scmp.eq.s32.totalorder %s14, 1
    %p46 = por %p44, %p45
    %p47 = scmp.ne.s32.totalorder %s36, %s37
    %p48 = scmp.eq.s32.totalorder %s14, 0
    %p49 = por %p47, %p48
    %p50 = scmp.ne.s32.totalorder %s36, %s37
    %p51 = scmp.eq.s32.totalorder %s15, 1
    %p52 = por %p50, %p51
    %p54 = scmp.ne.s32.totalorder %s37, %s53
    %p55 = scmp.eq.s32.totalorder %s15, 0
    %p56 = por %p54, %p55
    %s58 = sadd.s32 %s57, 1
    %p61 = scmp.eq.s32.totalorder %s9, 1
    %p62 = scmp.ne.s32.totalorder %s57, %s59
    %p63 = scmp.eq.s32.totalorder %s9, 0
    %p64 = por %p62, %p63
    %p65 = scmp.ne.s32.totalorder %s57, %s59
    %p66 = scmp.eq.s32.totalorder %s14, 1
    %p67 = por %p65, %p66
    %p68 = scmp.ne.s32.totalorder %s59, %s60
    %p69 = scmp.eq.s32.totalorder %s14, 0
    %p70 = por %p68, %p69
    %p71 = scmp.ne.s32.totalorder %s59, %s60
    %p72 = scmp.eq.s32.totalorder %s15, 1
    %p73 = por %p71, %p72
    %p75 = scmp.ne.s32.totalorder %s60, %s74
    %p76 = scmp.eq.s32.totalorder %s15, 0
    %p77 = por %p75, %p76
    %s78 = ssub.s32 %s16, %s28
    %p79 = scmp.eq.s32.totalorder %s78, 0
    %s81 = sadd.s32 %s80, 1
    %s82 = scalar_select %p79, %s80, %s81
    %p85 = pneg %p79
    %p86 = scmp.eq.s32.totalorder %s9, 1
    %p87 = por %p85, %p86
    %p88 = scmp.ne.s32.totalorder %s80, %s83
    %p89 = scmp.eq.s32.totalorder %s9, 0
    %p90 = por %p88, %p89
    %p91 = scmp.ne.s32.totalorder %s80, %s83
    %p92 = scmp.eq.s32.totalorder %s14, 1
    %p93 = por %p91, %p92
    %p94 = scmp.ne.s32.totalorder %s83, %s84
    %p95 = scmp.eq.s32.totalorder %s14, 0
    %p96 = por %p94, %p95
    %p97 = scmp.ne.s32.totalorder %s83, %s84
    %p98 = scmp.eq.s32.totalorder %s15, 1
    %p99 = por %p97, %p98
    %p101 = scmp.ne.s32.totalorder %s84, %s100
    %p102 = scmp.eq.s32.totalorder %s15, 0
    %p103 = por %p101, %p102
    %s104 = ssub.s32 %s17, %s24
    %s105 = ssub.s32 %s16, %s28
    %s106 = sor.u32 %s104, %s105
    %p107 = scmp.eq.s32.totalorder %s106, 0
    %s109 = sadd.s32 %s108, 1
    %s110 = scalar_select %p107, %s108, %s109
    %p113 = pneg %p107
    %p114 = scmp.eq.s32.totalorder %s9, 1
    %p115 = por %p113, %p114
    %p116 = scmp.ne.s32.totalorder %s108, %s111
    %p117 = scmp.eq.s32.totalorder %s9, 0
    %p118 = por %p116, %p117
    %p119 = scmp.ne.s32.totalorder %s108, %s111
    %p120 = scmp.eq.s32.totalorder %s14, 1
    %p121 = por %p119, %p120
    %p122 = scmp.ne.s32.totalorder %s111, %s112
    %p123 = scmp.eq.s32.totalorder %s14, 0
    %p124 = por %p122, %p123
    %p125 = scmp.ne.s32.totalorder %s111, %s112
    %p126 = scmp.eq.s32.totalorder %s15, 1
    %p127 = por %p125, %p126
    %p129 = scmp.ne.s32.totalorder %s112, %s128
    %p130 = scmp.eq.s32.totalorder %s15, 0
    %p131 = por %p129, %p130
    %p132 = scmp.le.s32.totalorder 1, %s9
    %p133 = scmp.lt.s32.totalorder %s9, 3
    %p134 = pnand %p132, %p133
    %p135 = pneg %p134
    // Predicated region
    $region9: #{tpu_custom_call.1} parent=5 // pred_check
      _
    $region10: #{tpu_custom_call.1} parent=5 // pred_check_branch
      %137 = sbr.rel (%p134) target = $region12
    $region11: #{tpu_custom_call.1} parent=5 // pred_region
      %s138 = ssub.s32 %s9, 1
      // Predicated region
      $region13: #{tpu_custom_call.1} parent=11 // pred_check
        %p139 = pneg %p70
      $region14: #{tpu_custom_call.1} parent=11 // pred_check_branch
        %141 = sbr.rel (%p139) target = $region16
      $region15: #{tpu_custom_call.1} parent=11 // pred_region
        _
      $region16: #{tpu_custom_call.1} parent=11 // pred_fallthru
        _
      // Predicated region
      $region17: #{tpu_custom_call.1} parent=11 // pred_check
        %p142 = pneg %p96
      $region18: #{tpu_custom_call.1} parent=11 // pred_check_branch
        %144 = sbr.rel (%p142) target = $region20
      $region19: #{tpu_custom_call.1} parent=11 // pred_region
        %s145 = smul.u32 32, %s18
        %p146 = scmp.lt.s32.totalorder %s145, 31
        %s147 = scalar_select %p146, %s145, 31
        %s148 = smul.addr %s147, 8
        %s149 = scalar_lea.vmem %s2, %s148
        %s150 = smul.u32 32, %s18
      $region20: #{tpu_custom_call.1} parent=11 // pred_fallthru
        _
    $region12: #{tpu_custom_call.1} parent=5 // pred_fallthru
      _
    %p151 = scmp.lt.s32.totalorder %s9, 2
    // Predicated region
    $region21: #{tpu_custom_call.1} parent=5 // pred_check
      %p152 = pneg %p151
    $region22: #{tpu_custom_call.1} parent=5 // pred_check_branch
      %154 = sbr.rel (%p152) target = $region24
    $region23: #{tpu_custom_call.1} parent=5 // pred_region
      // Predicated region
      $region25: #{tpu_custom_call.1} parent=23 // pred_check
        %p155 = pneg %p43
      $region26: #{tpu_custom_call.1} parent=23 // pred_check_branch
        %157 = sbr.rel (%p155) target = $region28
      $region27: #{tpu_custom_call.1} parent=23 // pred_region
        %s158 = smul.u32 32, %s16
        %p159 = scmp.lt.s32.totalorder %s17, 1
        %s160 = scalar_select %p159, %s17, 1
        %p161 = scmp.lt.s32.totalorder %s158, 31
        %s162 = scalar_select %p161, %s158, 31
        %s163 = smul.addr %s160, 32
        %s164 = sadd.s32 %s162, %s163
        %s165 = smul.addr %s164, 8
        %s166 = scalar_lea.vmem %s0, %s165
        %s167 = smul.u32 32, %s16
      $region28: #{tpu_custom_call.1} parent=23 // pred_fallthru
        _
    $region24: #{tpu_custom_call.1} parent=5 // pred_fallthru
      _
    %p168 = scmp.le.s32.totalorder 1, %s9
    %p169 = scmp.lt.s32.totalorder %s9, 3
    %p170 = pnand %p168, %p169
    %p171 = pneg %p170
    // Predicated region
    $region29: #{tpu_custom_call.1} parent=5 // pred_check
      _
    $region30: #{tpu_custom_call.1} parent=5 // pred_check_branch
      %173 = sbr.rel (%p170) target = $region32
    $region31: #{tpu_custom_call.1} parent=5 // pred_region
      %s174 = ssub.s32 %s9, 1
      %s175 = smul.u32 32, %s18
      %p176 = scmp.lt.s32.totalorder %s19, 1
      %s177 = scalar_select %p176, %s19, 1
      %p178 = scmp.lt.s32.totalorder %s175, 31
      %s179 = scalar_select %p178, %s175, 31
      %s180 = smul.addr %s177, 32
      %s181 = sadd.s32 %s179, %s180
      %s182 = smul.addr %s181, 8
      %s183 = scalar_lea.vmem %s0, %s182
      %p184 = pneg %p49
      %p185 = pneg %p46
      %p186 = pneg %p70
      %p187 = pneg %p67
      %s188 = smul.u32 32, %s18
      %p189 = scmp.lt.s32.totalorder %s188, 31
      %s190 = scalar_select %p189, %s188, 31
      %s191 = smul.addr %s190, 8
      %s192 = scalar_lea.vmem %s2, %s191
      %p193 = pneg %p96
      %p194 = pneg %p93
      %p195 = pneg %p124
      %p196 = pneg %p121
      %s197 = smul.u32 32, %s18
      %p198 = scmp.lt.s32.totalorder %s19, 1
      %s199 = scalar_select %p198, %s19, 1
      %p200 = scmp.lt.s32.totalorder %s197, 31
      %s201 = scalar_select %p200, %s197, 31
      %s202 = smul.addr %s199, 32
      %s203 = sadd.s32 %s201, %s202
      %s204 = smul.addr %s203, 8
      %s205 = scalar_lea.vmem %s3, %s204
      %s206 = smul.u32 32, %s18
      %p207 = scmp.lt.s32.totalorder %s19, 1
      %s208 = scalar_select %p207, %s19, 1
      %p209 = scmp.lt.s32.totalorder %s206, 31
      %s210 = scalar_select %p209, %s206, 31
      %s211 = smul.addr %s208, 32
      %s212 = sadd.s32 %s210, %s211
      %s213 = smul.addr %s212, 8
      %s214 = scalar_lea.vmem %s0, %s213
      %s215 = smul.u32 32, %s18
      %s216 = smul.u32 32, %s18
      %p217 = scmp.lt.s32.totalorder %s216, 31
      %s218 = scalar_select %p217, %s216, 31
      %s219 = smul.addr %s218, 8
      %s220 = scalar_lea.vmem %s2, %s219
      %s221 = smul.u32 32, %s18
      %s222 = smul.u32 32, %s18
      %p223 = scmp.lt.s32.totalorder %s19, 1
      %s224 = scalar_select %p223, %s19, 1
      %p225 = scmp.lt.s32.totalorder %s222, 31
      %s226 = scalar_select %p225, %s222, 31
      %s227 = smul.addr %s224, 32
      %s228 = sadd.s32 %s226, %s227
      %s229 = smul.addr %s228, 8
      %s230 = scalar_lea.vmem %s3, %s229
      %s231 = smul.u32 32, %s18
      %v232 = vld [vmem:[%s214] sm:$0xff]
      %v233 = vld [vmem:[%s214 + $0x8] sm:$0xff]
      %v234 = vld [vmem:[%s214 + $0x10] sm:$0xff]
      %v235 = vld [vmem:[%s214 + $0x18] sm:$0xff]
      %v236 = vld [vmem:[%s214 + $0x20] sm:$0xff]
      %v237 = vld [vmem:[%s214 + $0x28] sm:$0xff]
      %v238 = vld [vmem:[%s214 + $0x30] sm:$0xff]
      %v239 = vld [vmem:[%s214 + $0x38] sm:$0xff]
      %v240 = vld [vmem:[%s214 + $0x40] sm:$0xff]
      %v241 = vld [vmem:[%s214 + $0x48] sm:$0xff]
      %v242 = vld [vmem:[%s214 + $0x50] sm:$0xff]
      %v243 = vld [vmem:[%s214 + $0x58] sm:$0xff]
      %v244 = vld [vmem:[%s214 + $0x60] sm:$0xff]
      %v245 = vld [vmem:[%s214 + $0x68] sm:$0xff]
      %v246 = vld [vmem:[%s214 + $0x70] sm:$0xff]
      %v247 = vld [vmem:[%s214 + $0x78] sm:$0xff]
      %v248 = vld [vmem:[%s214 + $0x80] sm:$0xff]
      %v249 = vld [vmem:[%s214 + $0x88] sm:$0xff]
      %v250 = vld [vmem:[%s214 + $0x90] sm:$0xff]
      %v251 = vld [vmem:[%s214 + $0x98] sm:$0xff]
      %v252 = vld [vmem:[%s214 + $0xa0] sm:$0xff]
      %v253 = vld [vmem:[%s214 + $0xa8] sm:$0xff]
      %v254 = vld [vmem:[%s214 + $0xb0] sm:$0xff]
      %v255 = vld [vmem:[%s214 + $0xb8] sm:$0xff]
      %v256 = vld [vmem:[%s214 + $0xc0] sm:$0xff]
      %v257 = vld [vmem:[%s214 + $0xc8] sm:$0xff]
      %v258 = vld [vmem:[%s214 + $0xd0] sm:$0xff]
      %v259 = vld [vmem:[%s214 + $0xd8] sm:$0xff]
      %v260 = vld [vmem:[%s214 + $0xe0] sm:$0xff]
      %v261 = vld [vmem:[%s214 + $0xe8] sm:$0xff]
      %v262 = vld [vmem:[%s214 + $0xf0] sm:$0xff]
      %v263 = vld [vmem:[%s214 + $0xf8] sm:$0xff]
      %v264 = vld [vmem:[%s1] sm:$0xff]
      %v265 = vld [vmem:[%s1 + $0x8] sm:$0xff]
      %v266 = vld [vmem:[%s1 + $0x10] sm:$0xff]
      %v267 = vld [vmem:[%s1 + $0x18] sm:$0xff]
      %v268 = vld [vmem:[%s1 + $0x20] sm:$0xf]
      %v269 = vld [vmem:[%s220] sm:$0xff]
      %v270 = vld [vmem:[%s220 + $0x8] sm:$0xff]
      %v271 = vld [vmem:[%s220 + $0x10] sm:$0xff]
      %v272 = vld [vmem:[%s220 + $0x18] sm:$0xff]
      %v273 = vld [vmem:[%s220 + $0x20] sm:$0xff]
      %v274 = vld [vmem:[%s220 + $0x28] sm:$0xff]
      %v275 = vld [vmem:[%s220 + $0x30] sm:$0xff]
      %v276 = vld [vmem:[%s220 + $0x38] sm:$0xff]
      %v277 = vld [vmem:[%s220 + $0x40] sm:$0xff]
      %v278 = vld [vmem:[%s220 + $0x48] sm:$0xff]
      %v279 = vld [vmem:[%s220 + $0x50] sm:$0xff]
      %v280 = vld [vmem:[%s220 + $0x58] sm:$0xff]
      %v281 = vld [vmem:[%s220 + $0x60] sm:$0xff]
      %v282 = vld [vmem:[%s220 + $0x68] sm:$0xff]
      %v283 = vld [vmem:[%s220 + $0x70] sm:$0xff]
      %v284 = vld [vmem:[%s220 + $0x78] sm:$0xff]
      %v285 = vld [vmem:[%s220 + $0x80] sm:$0xff]
      %v286 = vld [vmem:[%s220 + $0x88] sm:$0xff]
      %v287 = vld [vmem:[%s220 + $0x90] sm:$0xff]
      %v288 = vld [vmem:[%s220 + $0x98] sm:$0xff]
      %v289 = vld [vmem:[%s220 + $0xa0] sm:$0xff]
      %v290 = vld [vmem:[%s220 + $0xa8] sm:$0xff]
      %v291 = vld [vmem:[%s220 + $0xb0] sm:$0xff]
      %v292 = vld [vmem:[%s220 + $0xb8] sm:$0xff]
      %v293 = vld [vmem:[%s220 + $0xc0] sm:$0xff]
      %v294 = vld [vmem:[%s220 + $0xc8] sm:$0xff]
      %v295 = vld [vmem:[%s220 + $0xd0] sm:$0xff]
      %v296 = vld [vmem:[%s220 + $0xd8] sm:$0xff]
      %v297 = vld [vmem:[%s220 + $0xe0] sm:$0xff]
      %v298 = vld [vmem:[%s220 + $0xe8] sm:$0xff]
      %v299 = vld [vmem:[%s220 + $0xf0] sm:$0xff]
      %v300 = vld [vmem:[%s220 + $0xf8] sm:$0xff]
      %vm301 = vcmask 293888
      %v303 = vsel %vm301, %v232, 0
      %v306 = vsel %vm301, %v233, 0
      %v309 = vsel %vm301, %v234, 0
      %v312 = vsel %vm301, %v235, 0
      %v315 = vsel %vm301, %v236, 0
      %v318 = vsel %vm301, %v237, 0
      %v321 = vsel %vm301, %v238, 0
      %v324 = vsel %vm301, %v239, 0
      %v327 = vsel %vm301, %v240, 0
      %v330 = vsel %vm301, %v241, 0
      %v333 = vsel %vm301, %v242, 0
      %v336 = vsel %vm301, %v243, 0
      %v339 = vsel %vm301, %v244, 0
      %v342 = vsel %vm301, %v245, 0
      %v345 = vsel %vm301, %v246, 0
      %v348 = vsel %vm301, %v247, 0
      %v351 = vsel %vm301, %v248, 0
      %v354 = vsel %vm301, %v249, 0
      %v357 = vsel %vm301, %v250, 0
      %v360 = vsel %vm301, %v251, 0
      %v363 = vsel %vm301, %v252, 0
      %v366 = vsel %vm301, %v253, 0
      %v369 = vsel %vm301, %v254, 0
      %v372 = vsel %vm301, %v255, 0
      %v375 = vsel %vm301, %v256, 0
      %v378 = vsel %vm301, %v257, 0
      %v381 = vsel %vm301, %v258, 0
      %v384 = vsel %vm301, %v259, 0
      %v387 = vsel %vm301, %v260, 0
      %v390 = vsel %vm301, %v261, 0
      %v393 = vsel %vm301, %v262, 0
      %v396 = vsel %vm301, %v263, 0
      %vm398 = vcmask 1043456
      %v400 = vsel %vm398, %v268, 0
      %402 = vmatprep.subr.mxu0 0.0
      %403 = vmatpush1.msra.mxu0 %v264
      %404 = vmatprep.subr.mxu0 0.0
      %405 = vmatpush1.msra.mxu0 %v265
      %406 = vmatprep.subr.mxu0 0.0
      %407 = vmatpush1.msra.mxu0 %v266
      %408 = vmatprep.subr.mxu0 0.0
      %409 = vmatpush1.msra.mxu0 %v267
      %410 = vmatprep.subr.mxu0 0.0
      %411 = vmatpush1.msra.mxu0 %v400
      %412 = vmatprep.subr.mxu0 0.0
      %413 = vmatpush1.msra.mxu0 0.0
      %414 = vmatprep.subr.mxu0 0.0
      %415 = vmatpush1.msra.mxu0 0.0
      %416 = vmatprep.subr.mxu0 0.0
      %417 = vmatpush1.msra.mxu0 0.0
      %418 = vmatprep.subr.mxu0 0.0
      %419 = vmatpush1.msra.mxu0 0.0
      %420 = vmatprep.subr.mxu0 0.0
      %421 = vmatpush1.msra.mxu0 0.0
      %422 = vmatprep.subr.mxu0 0.0
      %423 = vmatpush1.msra.mxu0 0.0
      %424 = vmatprep.subr.mxu0 0.0
      %425 = vmatpush1.msra.mxu0 0.0
      %426 = vmatprep.subr.mxu0 0.0
      %427 = vmatpush1.msra.mxu0 0.0
      %428 = vmatprep.subr.mxu0 0.0
      %429 = vmatpush1.msra.mxu0 0.0
      %430 = vmatprep.subr.mxu0 0.0
      %431 = vmatpush1.msra.mxu0 0.0
      %432 = vmatprep.subr.mxu0 0.0
      %433 = vmatpush1.msra.mxu0 0.0
      %434 = vmatprep.subr.mxu0 0.0
      %435 = vmatpush1.msra.mxu0 0.0
      %436 = vmatprep.subr.mxu0 0.0
      %437 = vmatpush1.msra.mxu0 0.0
      %438 = vmatprep.subr.mxu0 0.0
      %439 = vmatpush1.msra.mxu0 0.0
      %440 = vmatprep.subr.mxu0 0.0
      %441 = vmatpush1.msra.mxu0 0.0
      %442 = vmatprep.subr.mxu0 0.0
      %443 = vmatpush1.msra.mxu0 0.0
      %444 = vmatprep.subr.mxu0 0.0
      %445 = vmatpush1.msra.mxu0 0.0
      %446 = vmatprep.subr.mxu0 0.0
      %447 = vmatpush1.msra.mxu0 0.0
      %448 = vmatprep.subr.mxu0 0.0
      %449 = vmatpush1.msra.mxu0 0.0
      %450 = vmatprep.subr.mxu0 0.0
      %451 = vmatpush1.msra.mxu0 0.0
      %452 = vmatprep.subr.mxu0 0.0
      %453 = vmatpush1.msra.mxu0 0.0
      %454 = vmatprep.subr.mxu0 0.0
      %455 = vmatpush1.msra.mxu0 0.0
      %456 = vmatprep.subr.mxu0 0.0
      %457 = vmatpush1.msra.mxu0 0.0
      %458 = vmatprep.subr.mxu0 0.0
      %459 = vmatpush1.msra.mxu0 0.0
      %460 = vmatprep.subr.mxu0 0.0
      %461 = vmatpush1.msra.mxu0 0.0
      %462 = vmatprep.subr.mxu0 0.0
      %463 = vmatpush1.msra.mxu0 0.0
      %464 = vmatprep.subr.mxu0 0.0
      %465 = vmatpush1.msra.mxu0 0.0
      %466 = vmatprep.mubr.f32.mxu0 0.0
      %467 = vmatmul.mubr.f32.gmra.mrb[0].mxu0 %v303
      %v468 = vpop.f32.mrb[0].mxu0
      %v469 = vadd.f32 %v269, %v468
      %v470 = vpop.f32.mrb[0].mxu0
      %471 = vmatprep.mubr.f32.mxu0 0.0
      %472 = vmatmul.mubr.f32.gmra.mrb[0].mxu0 %v306
      %v473 = vpop.f32.mrb[0].mxu0
      %v474 = vadd.f32 %v270, %v473
      %v475 = vpop.f32.mrb[0].mxu0
      %476 = vmatprep.mubr.f32.mxu0 0.0
      %477 = vmatmul.mubr.f32.gmra.mrb[0].mxu0 %v309
      %v478 = vpop.f32.mrb[0].mxu0
      %v479 = vadd.f32 %v271, %v478
      %v480 = vpop.f32.mrb[0].mxu0
      %481 = vmatprep.mubr.f32.mxu0 0.0
      %482 = vmatmul.mubr.f32.gmra.mrb[0].mxu0 %v312
      %v483 = vpop.f32.mrb[0].mxu0
      %v484 = vadd.f32 %v272, %v483
      %v485 = vpop.f32.mrb[0].mxu0
      %486 = vmatprep.mubr.f32.mxu0 0.0
      %487 = vmatmul.mubr.f32.gmra.mrb[0].mxu0 %v315
      %v488 = vpop.f32.mrb[0].mxu0
      %v489 = vadd.f32 %v273, %v488
      %v490 = vpop.f32.mrb[0].mxu0
      %491 = vmatprep.mubr.f32.mxu0 0.0
      %492 = vmatmul.mubr.f32.gmra.mrb[0].mxu0 %v318
      %v493 = vpop.f32.mrb[0].mxu0
      %v494 = vadd.f32 %v274, %v493
      %v495 = vpop.f32.mrb[0].mxu0
      %496 = vmatprep.mubr.f32.mxu0 0.0
      %497 = vmatmul.mubr.f32.gmra.mrb[0].mxu0 %v321
      %v498 = vpop.f32.mrb[0].mxu0
      %v499 = vadd.f32 %v275, %v498
      %v500 = vpop.f32.mrb[0].mxu0
      %501 = vmatprep.mubr.f32.mxu0 0.0
      %502 = vmatmul.mubr.f32.gmra.mrb[0].mxu0 %v324
      %v503 = vpop.f32.mrb[0].mxu0
      %v504 = vadd.f32 %v276, %v503
      %v505 = vpop.f32.mrb[0].mxu0
      %506 = vmatprep.mubr.f32.mxu0 0.0
      %507 = vmatmul.mubr.f32.gmra.mrb[0].mxu0 %v327
      %v508 = vpop.f32.mrb[0].mxu0
      %v509 = vadd.f32 %v277, %v508
      %v510 = vpop.f32.mrb[0].mxu0
      %511 = vmatprep.mubr.f32.mxu0 0.0
      %512 = vmatmul.mubr.f32.gmra.mrb[0].mxu0 %v330
      %v513 = vpop.f32.mrb[0].mxu0
      %v514 = vadd.f32 %v278, %v513
      %v515 = vpop.f32.mrb[0].mxu0
      %516 = vmatprep.mubr.f32.mxu0 0.0
      %517 = vmatmul.mubr.f32.gmra.mrb[0].mxu0 %v333
      %v518 = vpop.f32.mrb[0].mxu0
      %v519 = vadd.f32 %v279, %v518
      %v520 = vpop.f32.mrb[0].mxu0
      %521 = vmatprep.mubr.f32.mxu0 0.0
      %522 = vmatmul.mubr.f32.gmra.mrb[0].mxu0 %v336
      %v523 = vpop.f32.mrb[0].mxu0
      %v524 = vadd.f32 %v280, %v523
      %v525 = vpop.f32.mrb[0].mxu0
      %526 = vmatprep.mubr.f32.mxu0 0.0
      %527 = vmatmul.mubr.f32.gmra.mrb[0].mxu0 %v339
      %v528 = vpop.f32.mrb[0].mxu0
      %v529 = vadd.f32 %v281, %v528
      %v530 = vpop.f32.mrb[0].mxu0
      %531 = vmatprep.mubr.f32.mxu0 0.0
      %532 = vmatmul.mubr.f32.gmra.mrb[0].mxu0 %v342
      %v533 = vpop.f32.mrb[0].mxu0
      %v534 = vadd.f32 %v282, %v533
      %v535 = vpop.f32.mrb[0].mxu0
      %536 = vmatprep.mubr.f32.mxu0 0.0
      %537 = vmatmul.mubr.f32.gmra.mrb[0].mxu0 %v345
      %v538 = vpop.f32.mrb[0].mxu0
      %v539 = vadd.f32 %v283, %v538
      %v540 = vpop.f32.mrb[0].mxu0
      %541 = vmatprep.mubr.f32.mxu0 0.0
      %542 = vmatmul.mubr.f32.gmra.mrb[0].mxu0 %v348
      %v543 = vpop.f32.mrb[0].mxu0
      %v544 = vadd.f32 %v284, %v543
      %v545 = vpop.f32.mrb[0].mxu0
      %546 = vmatprep.mubr.f32.mxu0 0.0
      %547 = vmatmul.mubr.f32.gmra.mrb[0].mxu0 %v351
      %v548 = vpop.f32.mrb[0].mxu0
      %v549 = vadd.f32 %v285, %v548
      %v550 = vpop.f32.mrb[0].mxu0
      %551 = vmatprep.mubr.f32.mxu0 0.0
      %552 = vmatmul.mubr.f32.gmra.mrb[0].mxu0 %v354
      %v553 = vpop.f32.mrb[0].mxu0
      %v554 = vadd.f32 %v286, %v553
      %v555 = vpop.f32.mrb[0].mxu0
      %556 = vmatprep.mubr.f32.mxu0 0.0
      %557 = vmatmul.mubr.f32.gmra.mrb[0].mxu0 %v357
      %v558 = vpop.f32.mrb[0].mxu0
      %v559 = vadd.f32 %v287, %v558
      %v560 = vpop.f32.mrb[0].mxu0
      %561 = vmatprep.mubr.f32.mxu0 0.0
      %562 = vmatmul.mubr.f32.gmra.mrb[0].mxu0 %v360
      %v563 = vpop.f32.mrb[0].mxu0
      %v564 = vadd.f32 %v288, %v563
      %v565 = vpop.f32.mrb[0].mxu0
      %566 = vmatprep.mubr.f32.mxu0 0.0
      %567 = vmatmul.mubr.f32.gmra.mrb[0].mxu0 %v363
      %v568 = vpop.f32.mrb[0].mxu0
      %v569 = vadd.f32 %v289, %v568
      %v570 = vpop.f32.mrb[0].mxu0
      %571 = vmatprep.mubr.f32.mxu0 0.0
      %572 = vmatmul.mubr.f32.gmra.mrb[0].mxu0 %v366
      %v573 = vpop.f32.mrb[0].mxu0
      %v574 = vadd.f32 %v290, %v573
      %v575 = vpop.f32.mrb[0].mxu0
      %576 = vmatprep.mubr.f32.mxu0 0.0
      %577 = vmatmul.mubr.f32.gmra.mrb[0].mxu0 %v369
      %v578 = vpop.f32.mrb[0].mxu0
      %v579 = vadd.f32 %v291, %v578
      %v580 = vpop.f32.mrb[0].mxu0
      %581 = vmatprep.mubr.f32.mxu0 0.0
      %582 = vmatmul.mubr.f32.gmra.mrb[0].mxu0 %v372
      %v583 = vpop.f32.mrb[0].mxu0
      %v584 = vadd.f32 %v292, %v583
      %v585 = vpop.f32.mrb[0].mxu0
      %586 = vmatprep.mubr.f32.mxu0 0.0
      %587 = vmatmul.mubr.f32.gmra.mrb[0].mxu0 %v375
      %v588 = vpop.f32.mrb[0].mxu0
      %v589 = vadd.f32 %v293, %v588
      %v590 = vpop.f32.mrb[0].mxu0
      %591 = vmatprep.mubr.f32.mxu0 0.0
      %592 = vmatmul.mubr.f32.gmra.mrb[0].mxu0 %v378
      %v593 = vpop.f32.mrb[0].mxu0
      %v594 = vadd.f32 %v294, %v593
      %v595 = vpop.f32.mrb[0].mxu0
      %596 = vmatprep.mubr.f32.mxu0 0.0
      %597 = vmatmul.mubr.f32.gmra.mrb[0].mxu0 %v381
      %v598 = vpop.f32.mrb[0].mxu0
      %v599 = vadd.f32 %v295, %v598
      %v600 = vpop.f32.mrb[0].mxu0
      %601 = vmatprep.mubr.f32.mxu0 0.0
      %602 = vmatmul.mubr.f32.gmra.mrb[0].mxu0 %v384
      %v603 = vpop.f32.mrb[0].mxu0
      %v604 = vadd.f32 %v296, %v603
      %v605 = vpop.f32.mrb[0].mxu0
      %606 = vmatprep.mubr.f32.mxu0 0.0
      %607 = vmatmul.mubr.f32.gmra.mrb[0].mxu0 %v387
      %v608 = vpop.f32.mrb[0].mxu0
      %v609 = vadd.f32 %v297, %v608
      %v610 = vpop.f32.mrb[0].mxu0
      %611 = vmatprep.mubr.f32.mxu0 0.0
      %612 = vmatmul.mubr.f32.gmra.mrb[0].mxu0 %v390
      %v613 = vpop.f32.mrb[0].mxu0
      %v614 = vadd.f32 %v298, %v613
      %v615 = vpop.f32.mrb[0].mxu0
      %616 = vmatprep.mubr.f32.mxu0 0.0
      %617 = vmatmul.mubr.f32.gmra.mrb[0].mxu0 %v393
      %v618 = vpop.f32.mrb[0].mxu0
      %v619 = vadd.f32 %v299, %v618
      %v620 = vpop.f32.mrb[0].mxu0
      %621 = vmatprep.mubr.f32.mxu0 0.0
      %622 = vmatmul.mubr.f32.gmra.mrb[0].mxu0 %v396
      %v623 = vpop.f32.mrb[0].mxu0
      %v624 = vadd.f32 %v300, %v623
      %v625 = vpop.f32.mrb[0].mxu0
      %626 = vdwg.mxu0
      %vm627 = vcmask 64512
      %628 = vst.msk [vmem:[%s230] sm:$0xff] %vm627, %v469
      %629 = vst.msk [vmem:[%s230 + $0x8] sm:$0xff] %vm627, %v474
      %630 = vst.msk [vmem:[%s230 + $0x10] sm:$0xff] %vm627, %v479
      %631 = vst.msk [vmem:[%s230 + $0x18] sm:$0xff] %vm627, %v484
      %632 = vst.msk [vmem:[%s230 + $0x20] sm:$0xff] %vm627, %v489
      %633 = vst.msk [vmem:[%s230 + $0x28] sm:$0xff] %vm627, %v494
      %634 = vst.msk [vmem:[%s230 + $0x30] sm:$0xff] %vm627, %v499
      %635 = vst.msk [vmem:[%s230 + $0x38] sm:$0xff] %vm627, %v504
      %636 = vst.msk [vmem:[%s230 + $0x40] sm:$0xff] %vm627, %v509
      %637 = vst.msk [vmem:[%s230 + $0x48] sm:$0xff] %vm627, %v514
      %638 = vst.msk [vmem:[%s230 + $0x50] sm:$0xff] %vm627, %v519
      %639 = vst.msk [vmem:[%s230 + $0x58] sm:$0xff] %vm627, %v524
      %640 = vst.msk [vmem:[%s230 + $0x60] sm:$0xff] %vm627, %v529
      %641 = vst.msk [vmem:[%s230 + $0x68] sm:$0xff] %vm627, %v534
      %642 = vst.msk [vmem:[%s230 + $0x70] sm:$0xff] %vm627, %v539
      %643 = vst.msk [vmem:[%s230 + $0x78] sm:$0xff] %vm627, %v544
      %644 = vst.msk [vmem:[%s230 + $0x80] sm:$0xff] %vm627, %v549
      %645 = vst.msk [vmem:[%s230 + $0x88] sm:$0xff] %vm627, %v554
      %646 = vst.msk [vmem:[%s230 + $0x90] sm:$0xff] %vm627, %v559
      %647 = vst.msk [vmem:[%s230 + $0x98] sm:$0xff] %vm627, %v564
      %648 = vst.msk [vmem:[%s230 + $0xa0] sm:$0xff] %vm627, %v569
      %649 = vst.msk [vmem:[%s230 + $0xa8] sm:$0xff] %vm627, %v574
      %650 = vst.msk [vmem:[%s230 + $0xb0] sm:$0xff] %vm627, %v579
      %651 = vst.msk [vmem:[%s230 + $0xb8] sm:$0xff] %vm627, %v584
      %652 = vst.msk [vmem:[%s230 + $0xc0] sm:$0xff] %vm627, %v589
      %653 = vst.msk [vmem:[%s230 + $0xc8] sm:$0xff] %vm627, %v594
      %654 = vst.msk [vmem:[%s230 + $0xd0] sm:$0xff] %vm627, %v599
      %655 = vst.msk [vmem:[%s230 + $0xd8] sm:$0xff] %vm627, %v604
      %656 = vst.msk [vmem:[%s230 + $0xe0] sm:$0xff] %vm627, %v609
      %657 = vst.msk [vmem:[%s230 + $0xe8] sm:$0xff] %vm627, %v614
      %658 = vst.msk [vmem:[%s230 + $0xf0] sm:$0xff] %vm627, %v619
      %659 = vst.msk [vmem:[%s230 + $0xf8] sm:$0xff] %vm627, %v624
      %s660 = smul.u32 32, %s18
      %p661 = scmp.lt.s32.totalorder %s19, 1
      %s662 = scalar_select %p661, %s19, 1
      %p663 = scmp.lt.s32.totalorder %s660, 31
      %s664 = scalar_select %p663, %s660, 31
      %s665 = smul.addr %s662, 32
      %s666 = sadd.s32 %s664, %s665
      %s667 = smul.addr %s666, 8
      %s668 = scalar_lea.vmem %s3, %s667
      // Predicated region
      $region33: #{tpu_custom_call.1} parent=31 // pred_check
        %p669 = pneg %p121
      $region34: #{tpu_custom_call.1} parent=31 // pred_check_branch
        %671 = sbr.rel (%p669) target = $region36
      $region35: #{tpu_custom_call.1} parent=31 // pred_region
        %s672 = smul.u32 32, %s18
      $region36: #{tpu_custom_call.1} parent=31 // pred_fallthru
        _
    $region32: #{tpu_custom_call.1} parent=5 // pred_fallthru
      _
    %p673 = scmp.le.s32.totalorder 2, %s9
    // Predicated region
    $region37: #{tpu_custom_call.1} parent=5 // pred_check
      %p674 = pneg %p673
    $region38: #{tpu_custom_call.1} parent=5 // pred_check_branch
      %676 = sbr.rel (%p674) target = $region40
    $region39: #{tpu_custom_call.1} parent=5 // pred_region
      %s677 = ssub.s32 %s9, 2
      // Predicated region
      $region41: #{tpu_custom_call.1} parent=39 // pred_check
        %p678 = pneg %p127
      $region42: #{tpu_custom_call.1} parent=39 // pred_check_branch
        %680 = sbr.rel (%p678) target = $region44
      $region43: #{tpu_custom_call.1} parent=39 // pred_region
        %s681 = smul.u32 32, %s20
        %p682 = scmp.lt.s32.totalorder %s21, 1
        %s683 = scalar_select %p682, %s21, 1
        %p684 = scmp.lt.s32.totalorder %s681, 31
        %s685 = scalar_select %p684, %s681, 31
        %s686 = smul.addr %s683, 32
        %s687 = sadd.s32 %s685, %s686
        %s688 = smul.addr %s687, 8
        %s689 = scalar_lea.vmem %s3, %s688
      $region44: #{tpu_custom_call.1} parent=39 // pred_fallthru
        _
    $region40: #{tpu_custom_call.1} parent=5 // pred_fallthru
      _
  $region6: #{tpu_custom_call.1} parent=0 // loop_footer
    %s13 = sadd.s32 1, %s9
  $region7: #{tpu_custom_call.1} parent=0 // loop_footer_branch
    %8 = sbr.rel target = $region3
  $region8: #{tpu_custom_call.1} parent=0 // loop_exit
    _

</llo_original>
